<compile_context>
chip_gen: v7x
topology: tpu7x:2x2x1
jax: 0.10.0
libtpu: 0.0.40
codegen_flags: <defaults>
</compile_context>

<pallas_src>
import jax
import jax.numpy as jnp
from jax.experimental import pallas as pl
from jax.experimental.pallas import tpu as pltpu

EPS = 1e-5


def _layernorm_kernel(x_ref, w_ref, b_ref, o_ref):
    # x_ref: (TILE_B, C, TILE_S) — C on sublanes, spatial on lanes.
    # w_ref / b_ref: (1, C, 1) — broadcast over batch and spatial axes.
    x = x_ref[...].astype(jnp.float32)                       # f32 accumulation
    inv_c = 1.0 / x.shape[1]

    # One-pass statistics over the channel axis (axis=1).
    # (E[x^2]-mean^2 can lose precision when |mean| >> std; fine for
    #  activation-scale inputs and the tested tolerances.)
    mean = jnp.sum(x, axis=1, keepdims=True) * inv_c          # (TB, 1, TS)
    mean_sq = jnp.sum(x * x, axis=1, keepdims=True) * inv_c   # (TB, 1, TS)
    var = mean_sq - mean * mean
    inv = jax.lax.rsqrt(var + EPS)                            # EUP rsqrt

    w = w_ref[...].astype(jnp.float32)                        # (1, C, 1)
    b = b_ref[...].astype(jnp.float32)                        # (1, C, 1)
    # 4-op affine; keep f32 (VALU only approaches saturation for bf16 on v7x).
    o_ref[...] = ((x - mean) * inv * w + b).astype(o_ref.dtype)


def _generation_budget():
    """(block_bytes, vmem_cap_bytes) keyed off the TPU generation."""
    kind = ""
    try:
        kind = jax.devices()[0].device_kind.lower()
    except Exception:
        pass
    if "v7" in kind:
        return 4 << 20, 48 << 20          # 64 MiB physical VMEM -> headroom
    if "v6" in kind or "trillium" in kind:
        return 4 << 20, 48 << 20          # 128 MiB physical, 32 MiB default
    if "v5 lite" in kind or "v5e" in kind or "v5lite" in kind:
        return 2 << 20, 32 << 20          # lift past the 16 MiB scoped default
    return 2 << 20, 32 << 20              # conservative fallback


def _pick_tile_s(spatial, channels, itemsize, block_bytes):
    """Balanced, lane-aligned spatial tile under a per-block byte budget."""
    max_tile = max(128, block_bytes // max(1, channels * itemsize))
    if spatial <= max_tile:
        return spatial                     # full extent: always a legal block
    num_lane_blocks = pl.cdiv(spatial, 128)
    num_steps = pl.cdiv(spatial, max_tile)
    # Spread lane-blocks evenly over the minimum number of steps so the
    # ragged tail block is not nearly empty.
    return 128 * pl.cdiv(num_lane_blocks, num_steps)


def layer_norm_proxy(x, weight, bias, *, block_bytes=None):
    """x: (B, C, H, W) -> LayerNorm over C (eps=1e-5, affine) -> (B, C, H, W)."""
    B, C, H, W = x.shape
    S = H * W
    itemsize = jnp.dtype(x.dtype).itemsize

    gen_block_bytes, vmem_cap = _generation_budget()
    if block_bytes is None:
        block_bytes = gen_block_bytes

    # Free reshapes only — no transposes, no padding, no extra HBM traffic.
    x3 = x.reshape(B, C, S)
    w3 = weight.reshape(1, C, 1)
    b3 = bias.reshape(1, C, 1)

    if S < 128:
        # Small-spatial guard: lane width < 128 -> stores are masked anyway,
        # so amortize per-step overhead by processing several batch elements
        # per grid step.
        tile_s = S
        per_b_bytes = max(1, C * S * itemsize)
        tile_b = max(1, min(B, block_bytes // per_b_bytes))
        num_b = pl.cdiv(B, tile_b)
        tile_b = pl.cdiv(B, num_b)        # rebalance blocks over batch
    else:
        tile_b = 1
        tile_s = _pick_tile_s(S, C, itemsize, block_bytes)
        num_b = B
    num_s = pl.cdiv(S, tile_s)

    # Explicit VMEM budget: double-buffered in/out blocks + ~3 f32-sized
    # in-kernel temporaries (x, x*x, y) + slack; capped per generation.
    in_block = tile_b * C * tile_s * itemsize
    f32_block = tile_b * C * tile_s * 4
    need = 4 * in_block + 3 * f32_block + (2 << 20)
    vmem_limit = int(min(vmem_cap, max(need, 16 << 20)))

    out3 = pl.pallas_call(
        _layernorm_kernel,
        out_shape=jax.ShapeDtypeStruct((B, C, S), x.dtype),
        grid_spec=pltpu.PrefetchScalarGridSpec(
            num_scalar_prefetch=0,
            grid=(num_b, num_s),
            in_specs=[
                pl.BlockSpec((tile_b, C, tile_s), lambda bi, si: (bi, 0, si)),
                pl.BlockSpec((1, C, 1), lambda bi, si: (0, 0, 0)),
                pl.BlockSpec((1, C, 1), lambda bi, si: (0, 0, 0)),
            ],
            out_specs=pl.BlockSpec((tile_b, C, tile_s),
                                   lambda bi, si: (bi, 0, si)),
        ),
        compiler_params=pltpu.CompilerParams(
            dimension_semantics=("parallel", "parallel"),
            vmem_limit_bytes=vmem_limit,
        ),
        cost_estimate=pl.CostEstimate(
            flops=8 * B * C * S,
            transcendentals=B * S,
            bytes_accessed=2 * B * C * S * itemsize + 2 * C * 4,
        ),
    )(x3, w3, b3)

    return out3.reshape(B, C, H, W)


if __name__ == "__main__":
    key = jax.random.PRNGKey(0)
    B, C, H, W = 2, 4, 16, 16
    x = jax.random.normal(key, (B, C, H, W), dtype=jnp.float32)

    # Deterministic, non-trivial LayerNorm affine params (dim = C).
    weight = 1.0 + 0.1 * jnp.arange(C, dtype=jnp.float32)
    bias = 0.05 * jnp.arange(C, dtype=jnp.float32)

    out = jax.jit(layer_norm_proxy)(x, weight, bias)
    out = jax.block_until_ready(out)

    # Reference (plain JAX, matches PyTorch nn.LayerNorm semantics).
    x_nhwc = jnp.transpose(x, (0, 2, 3, 1))
    mean = jnp.mean(x_nhwc, axis=-1, keepdims=True)
    var = jnp.mean((x_nhwc - mean) ** 2, axis=-1, keepdims=True)
    ref_nhwc = (x_nhwc - mean) * jax.lax.rsqrt(var + EPS) * weight + bias
    ref = jnp.transpose(ref_nhwc, (0, 3, 1, 2))

    assert out.shape == (B, C, H, W)
    assert jnp.allclose(out, ref, atol=1e-5, rtol=1e-5)

    # Also exercise the small-S (lane < 128) batched path once.
    x_small = jax.random.normal(key, (B, C, 7, 7), dtype=jnp.float32)
    out_small = jax.block_until_ready(jax.jit(layer_norm_proxy)(x_small, weight, bias))
    xs_nhwc = jnp.transpose(x_small, (0, 2, 3, 1))
    ms = jnp.mean(xs_nhwc, axis=-1, keepdims=True)
    vs = jnp.mean((xs_nhwc - ms) ** 2, axis=-1, keepdims=True)
    ref_small = jnp.transpose((xs_nhwc - ms) * jax.lax.rsqrt(vs + EPS) * weight + bias,
                              (0, 3, 1, 2))
    assert jnp.allclose(out_small, ref_small, atol=1e-5, rtol=1e-5)

    print("KERNEL_OK")
</pallas_src>

<mosaic_0001>
module attributes {stable_mosaic.version = 11 : i64} {
  func.func @_layernorm_kernel(%arg0: i32, %arg1: i32, %arg2: memref<1x4x256xf32, #tpu.memory_space<vmem>>, %arg3: memref<1x4x1xf32, #tpu.memory_space<vmem>>, %arg4: memref<1x4x1xf32, #tpu.memory_space<vmem>>, %arg5: memref<1x4x256xf32, #tpu.memory_space<vmem>>) attributes {dimension_semantics = [#tpu.dimension_semantics<parallel>, #tpu.dimension_semantics<parallel>], iteration_bounds = array<i64: 2, 1>, scalar_prefetch = 0 : i64, scratch_operands = 0 : i64, tpu.core_type = #tpu.core_type<tc>, window_params = [{transform_indices = @transform_0, window_bounds = array<i64: 1, 4, 256>}, {pipeline_mode = #tpu.pipeline_mode<synchronous>, transform_indices = @transform_1, window_bounds = array<i64: 1, 4, 1>}, {pipeline_mode = #tpu.pipeline_mode<synchronous>, transform_indices = @transform_2, window_bounds = array<i64: 1, 4, 1>}, {transform_indices = @transform_3, window_bounds = array<i64: 1, 4, 256>}]} {
    %c0 = arith.constant 0 : index
    %c0_0 = arith.constant 0 : index
    %c0_1 = arith.constant 0 : index
    %0 = vector.load %arg2[%c0, %c0_0, %c0_1] : memref<1x4x256xf32, #tpu.memory_space<vmem>>, vector<1x4x256xf32>
    %cst = arith.constant dense<0.000000e+00> : vector<1x256xf32>
    %1 = vector.multi_reduction <add>, %0, %cst [1] : vector<1x4x256xf32> to vector<1x256xf32>
    %2 = vector.shape_cast %1 : vector<1x256xf32> to vector<1x1x256xf32>
    %cst_2 = arith.constant 2.500000e-01 : f32
    %3 = vector.broadcast %cst_2 : f32 to vector<1x1x256xf32>
    %4 = arith.mulf %2, %3 : vector<1x1x256xf32>
    %5 = arith.mulf %0, %0 : vector<1x4x256xf32>
    %cst_3 = arith.constant dense<0.000000e+00> : vector<1x256xf32>
    %6 = vector.multi_reduction <add>, %5, %cst_3 [1] : vector<1x4x256xf32> to vector<1x256xf32>
    %7 = vector.shape_cast %6 : vector<1x256xf32> to vector<1x1x256xf32>
    %cst_4 = arith.constant 2.500000e-01 : f32
    %8 = vector.broadcast %cst_4 : f32 to vector<1x1x256xf32>
    %9 = arith.mulf %7, %8 : vector<1x1x256xf32>
    %10 = arith.mulf %4, %4 : vector<1x1x256xf32>
    %11 = arith.subf %9, %10 : vector<1x1x256xf32>
    %cst_5 = arith.constant 9.99999974E-6 : f32
    %12 = vector.broadcast %cst_5 : f32 to vector<1x1x256xf32>
    %13 = arith.addf %11, %12 : vector<1x1x256xf32>
    %14 = math.rsqrt %13 : vector<1x1x256xf32>
    %c0_6 = arith.constant 0 : index
    %c0_7 = arith.constant 0 : index
    %c0_8 = arith.constant 0 : index
    %15 = vector.load %arg3[%c0_6, %c0_7, %c0_8] : memref<1x4x1xf32, #tpu.memory_space<vmem>>, vector<1x4x1xf32>
    %c0_9 = arith.constant 0 : index
    %c0_10 = arith.constant 0 : index
    %c0_11 = arith.constant 0 : index
    %16 = vector.load %arg4[%c0_9, %c0_10, %c0_11] : memref<1x4x1xf32, #tpu.memory_space<vmem>>, vector<1x4x1xf32>
    %17 = vector.broadcast %4 : vector<1x1x256xf32> to vector<1x4x256xf32>
    %18 = arith.subf %0, %17 : vector<1x4x256xf32>
    %19 = vector.broadcast %14 : vector<1x1x256xf32> to vector<1x4x256xf32>
    %20 = arith.mulf %18, %19 : vector<1x4x256xf32>
    %21 = vector.broadcast %15 : vector<1x4x1xf32> to vector<1x4x256xf32>
    %22 = arith.mulf %20, %21 : vector<1x4x256xf32>
    %23 = vector.broadcast %16 : vector<1x4x1xf32> to vector<1x4x256xf32>
    %24 = arith.addf %22, %23 : vector<1x4x256xf32>
    %c0_12 = arith.constant 0 : index
    %c0_13 = arith.constant 0 : index
    %c0_14 = arith.constant 0 : index
    %25 = vector.load %arg5[%c0_12, %c0_13, %c0_14] : memref<1x4x256xf32, #tpu.memory_space<vmem>>, vector<1x4x256xf32>
    tpu.vector_store %arg5[%c0_12, %c0_13, %c0_14], %24 {strides = array<i32>} : memref<1x4x256xf32, #tpu.memory_space<vmem>>, vector<1x4x256xf32>,
    return
  }
  func.func @transform_0(%arg0: i32, %arg1: i32) -> (i32, i32, i32) {
    %c0_i32 = arith.constant 0 : i32
    %c0_i32_0 = arith.constant 0 : i32
    return %arg0, %c0_i32, %arg1 : i32, i32, i32
  }
  func.func @transform_1(%arg0: i32, %arg1: i32) -> (i32, i32, i32) {
    %c0_i32 = arith.constant 0 : i32
    %c0_i32_0 = arith.constant 0 : i32
    %c0_i32_1 = arith.constant 0 : i32
    %c0_i32_2 = arith.constant 0 : i32
    return %c0_i32, %c0_i32_0, %c0_i32_1 : i32, i32, i32
  }
  func.func @transform_2(%arg0: i32, %arg1: i32) -> (i32, i32, i32) {
    %c0_i32 = arith.constant 0 : i32
    %c0_i32_0 = arith.constant 0 : i32
    %c0_i32_1 = arith.constant 0 : i32
    %c0_i32_2 = arith.constant 0 : i32
    return %c0_i32, %c0_i32_0, %c0_i32_1 : i32, i32, i32
  }
  func.func @transform_3(%arg0: i32, %arg1: i32) -> (i32, i32, i32) {
    %c0_i32 = arith.constant 0 : i32
    %c0_i32_0 = arith.constant 0 : i32
    return %arg0, %c0_i32, %arg1 : i32, i32, i32
  }
}

</mosaic_0001>

<llo_original>
// kernel: layer_norm_proxy.1
$region0: #{layer_norm_proxy.1}
  #allocation0 [shape = 'u32[]', space=smem, size = 0x4, offset = 0x4, fixed_abs, tag = 'smem constant byte address 0x4 - core index']
  #allocation1 [shape = 'u32[144,128]{1,0:T(1,128)}', space=vmem, size = 0x12000, scoped, tag = 'internal scratch']
  %s0 = inlined_call_operand.vmem [shape: f32[2,4,256], index: 0, kind: input, shape index: {}]
  %s1 = inlined_call_operand.vmem [shape: f32[1,4,1], index: 1, kind: input, shape index: {}]
  %s2 = inlined_call_operand.vmem [shape: f32[1,4,1], index: 2, kind: input, shape index: {}]
  %s3 = inlined_call_operand.vmem [shape: f32[2,4,256], index: 3, kind: output, shape index: {}]
  %s4 = sld [smem:[#allocation0]]
  $region45: #{layer_norm_proxy.1} parent=0
    _
  %s6 = ssub.s32 1, %s4
  %s7 = scalar_select 0, %s6, %s4
  loop: start=0, step=1, limit=4
  $region2: #{layer_norm_proxy.1} parent=0 // loop_pre_header
    _
  $region3: #{layer_norm_proxy.1} parent=0 // loop_header
    %s9 = sphi 0, %s13
    %p10 = scmp.ge.s32.totalorder %s9, 4
    %s16 = sphi 0, %s28
    %s17 = sphi 0, %s24
    %s18 = sphi 0, %s16
    %s19 = sphi 0, %s17
    %s20 = sphi 0, %s18
    %s21 = sphi 0, %s19
    %s33 = sphi 0, %s35
    %s36 = sphi 0, %s33
    %s37 = sphi 0, %s36
    %s53 = sphi 0, %s37
    %s57 = sphi 0, %s57
    %s59 = sphi 0, %s57
    %s60 = sphi 0, %s59
    %s74 = sphi 0, %s60
    %s78 = sphi 0, %s78
    %s80 = sphi 0, %s78
    %s81 = sphi 0, %s80
    %s95 = sphi 0, %s81
    %s103 = sphi 0, %s105
    %s106 = sphi 0, %s103
    %s107 = sphi 0, %s106
    %s123 = sphi 0, %s107
  $region4: #{layer_norm_proxy.1} parent=0 // loop_header_branch
    %12 = sbr.rel (%p10) target = $region8
  $region5: #{layer_norm_proxy.1} parent=0 // loop_body
    %s14 = ssub.s32 %s9, 1
    %s15 = ssub.s32 %s9, 2
    %s22 = sadd.s32 1, %s17
    %p23 = scmp.ge.s32.totalorder %s22, 1
    %s24 = scalar_select %p23, 0, %s22
    %s25 = sadd.s32 1, %s16
    %s26 = scalar_select %p23, %s25, %s16
    %p27 = scmp.ge.s32.totalorder %s26, 2
    %s28 = scalar_select %p27, 0, %s26
    %s29 = ssub.s32 %s16, %s28
    %s30 = ssub.s32 %s17, %s24
    %s31 = sor.u32 %s29, %s30
    %p32 = scmp.eq.s32.totalorder %s31, 0
    %s34 = sadd.s32 %s33, 1
    %s35 = scalar_select %p32, %s33, %s34
    %p38 = pneg %p32
    %p39 = scmp.eq.s32.totalorder %s9, 1
    %p40 = por %p38, %p39
    %p41 = scmp.ne.s32.totalorder %s33, %s36
    %p42 = scmp.eq.s32.totalorder %s9, 0
    %p43 = por %p41, %p42
    %p44 = scmp.ne.s32.totalorder %s33, %s36
    %p45 = scmp.eq.s32.totalorder %s14, 1
    %p46 = por %p44, %p45
    %p47 = scmp.ne.s32.totalorder %s36, %s37
    %p48 = scmp.eq.s32.totalorder %s14, 0
    %p49 = por %p47, %p48
    %p50 = scmp.ne.s32.totalorder %s36, %s37
    %p51 = scmp.eq.s32.totalorder %s15, 1
    %p52 = por %p50, %p51
    %p54 = scmp.ne.s32.totalorder %s37, %s53
    %p55 = scmp.eq.s32.totalorder %s15, 0
    %p56 = por %p54, %p55
    %s58 = sadd.s32 %s57, 1
    %p61 = scmp.eq.s32.totalorder %s9, 1
    %p62 = scmp.ne.s32.totalorder %s57, %s59
    %p63 = scmp.eq.s32.totalorder %s9, 0
    %p64 = por %p62, %p63
    %p65 = scmp.ne.s32.totalorder %s57, %s59
    %p66 = scmp.eq.s32.totalorder %s14, 1
    %p67 = por %p65, %p66
    %p68 = scmp.ne.s32.totalorder %s59, %s60
    %p69 = scmp.eq.s32.totalorder %s14, 0
    %p70 = por %p68, %p69
    %p71 = scmp.ne.s32.totalorder %s59, %s60
    %p72 = scmp.eq.s32.totalorder %s15, 1
    %p73 = por %p71, %p72
    %p75 = scmp.ne.s32.totalorder %s60, %s74
    %p76 = scmp.eq.s32.totalorder %s15, 0
    %p77 = por %p75, %p76
    %s79 = sadd.s32 %s78, 1
    %p82 = scmp.eq.s32.totalorder %s9, 1
    %p83 = scmp.ne.s32.totalorder %s78, %s80
    %p84 = scmp.eq.s32.totalorder %s9, 0
    %p85 = por %p83, %p84
    %p86 = scmp.ne.s32.totalorder %s78, %s80
    %p87 = scmp.eq.s32.totalorder %s14, 1
    %p88 = por %p86, %p87
    %p89 = scmp.ne.s32.totalorder %s80, %s81
    %p90 = scmp.eq.s32.totalorder %s14, 0
    %p91 = por %p89, %p90
    %p92 = scmp.ne.s32.totalorder %s80, %s81
    %p93 = scmp.eq.s32.totalorder %s15, 1
    %p94 = por %p92, %p93
    %p96 = scmp.ne.s32.totalorder %s81, %s95
    %p97 = scmp.eq.s32.totalorder %s15, 0
    %p98 = por %p96, %p97
    %s99 = ssub.s32 %s16, %s28
    %s100 = ssub.s32 %s17, %s24
    %s101 = sor.u32 %s99, %s100
    %p102 = scmp.eq.s32.totalorder %s101, 0
    %s104 = sadd.s32 %s103, 1
    %s105 = scalar_select %p102, %s103, %s104
    %p108 = pneg %p102
    %p109 = scmp.eq.s32.totalorder %s9, 1
    %p110 = por %p108, %p109
    %p111 = scmp.ne.s32.totalorder %s103, %s106
    %p112 = scmp.eq.s32.totalorder %s9, 0
    %p113 = por %p111, %p112
    %p114 = scmp.ne.s32.totalorder %s103, %s106
    %p115 = scmp.eq.s32.totalorder %s14, 1
    %p116 = por %p114, %p115
    %p117 = scmp.ne.s32.totalorder %s106, %s107
    %p118 = scmp.eq.s32.totalorder %s14, 0
    %p119 = por %p117, %p118
    %p120 = scmp.ne.s32.totalorder %s106, %s107
    %p121 = scmp.eq.s32.totalorder %s15, 1
    %p122 = por %p120, %p121
    %p124 = scmp.ne.s32.totalorder %s107, %s123
    %p125 = scmp.eq.s32.totalorder %s15, 0
    %p126 = por %p124, %p125
    %p127 = scmp.le.s32.totalorder 1, %s9
    %p128 = scmp.lt.s32.totalorder %s9, 3
    %p129 = pnand %p127, %p128
    %p130 = pneg %p129
    // Predicated region
    $region9: #{layer_norm_proxy.1} parent=5 // pred_check
      _
    $region10: #{layer_norm_proxy.1} parent=5 // pred_check_branch
      %132 = sbr.rel (%p129) target = $region12
    $region11: #{layer_norm_proxy.1} parent=5 // pred_region
      %s133 = ssub.s32 %s9, 1
      // Predicated region
      $region13: #{layer_norm_proxy.1} parent=11 // pred_check
        %p134 = pneg %p70
      $region14: #{layer_norm_proxy.1} parent=11 // pred_check_branch
        %136 = sbr.rel (%p134) target = $region16
      $region15: #{layer_norm_proxy.1} parent=11 // pred_region
        _
      $region16: #{layer_norm_proxy.1} parent=11 // pred_fallthru
        _
      // Predicated region
      $region17: #{layer_norm_proxy.1} parent=11 // pred_check
        %p137 = pneg %p91
      $region18: #{layer_norm_proxy.1} parent=11 // pred_check_branch
        %139 = sbr.rel (%p137) target = $region20
      $region19: #{layer_norm_proxy.1} parent=11 // pred_region
        _
      $region20: #{layer_norm_proxy.1} parent=11 // pred_fallthru
        _
    $region12: #{layer_norm_proxy.1} parent=5 // pred_fallthru
      _
    %p140 = scmp.lt.s32.totalorder %s9, 2
    // Predicated region
    $region21: #{layer_norm_proxy.1} parent=5 // pred_check
      %p141 = pneg %p140
    $region22: #{layer_norm_proxy.1} parent=5 // pred_check_branch
      %143 = sbr.rel (%p141) target = $region24
    $region23: #{layer_norm_proxy.1} parent=5 // pred_region
      // Predicated region
      $region25: #{layer_norm_proxy.1} parent=23 // pred_check
        %p144 = pneg %p43
      $region26: #{layer_norm_proxy.1} parent=23 // pred_check_branch
        %146 = sbr.rel (%p144) target = $region28
      $region27: #{layer_norm_proxy.1} parent=23 // pred_region
        %s147 = smul.u32 2, %s17
        %p148 = scmp.lt.s32.totalorder %s16, 1
        %s149 = scalar_select %p148, %s16, 1
        %p150 = scmp.lt.s32.totalorder %s147, 1
        %s151 = scalar_select %p150, %s147, 1
        %s152 = smul.addr %s149, 2
        %s153 = sadd.s32 %s151, %s152
        %s154 = smul.addr %s153, 4
        %s155 = scalar_lea.vmem %s0, %s154
        %s156 = smul.u32 2, %s17
      $region28: #{layer_norm_proxy.1} parent=23 // pred_fallthru
        _
    $region24: #{layer_norm_proxy.1} parent=5 // pred_fallthru
      _
    %p157 = scmp.le.s32.totalorder 1, %s9
    %p158 = scmp.lt.s32.totalorder %s9, 3
    %p159 = pnand %p157, %p158
    %p160 = pneg %p159
    // Predicated region
    $region29: #{layer_norm_proxy.1} parent=5 // pred_check
      _
    $region30: #{layer_norm_proxy.1} parent=5 // pred_check_branch
      %162 = sbr.rel (%p159) target = $region32
    $region31: #{layer_norm_proxy.1} parent=5 // pred_region
      %s163 = ssub.s32 %s9, 1
      %s164 = smul.u32 2, %s19
      %p165 = scmp.lt.s32.totalorder %s18, 1
      %s166 = scalar_select %p165, %s18, 1
      %p167 = scmp.lt.s32.totalorder %s164, 1
      %s168 = scalar_select %p167, %s164, 1
      %s169 = smul.addr %s166, 2
      %s170 = sadd.s32 %s168, %s169
      %s171 = smul.addr %s170, 4
      %s172 = scalar_lea.vmem %s0, %s171
      %p173 = pneg %p49
      %p174 = pneg %p46
      %p175 = pneg %p70
      %p176 = pneg %p67
      %p177 = pneg %p91
      %p178 = pneg %p88
      %p179 = pneg %p119
      %p180 = pneg %p116
      %s181 = smul.u32 2, %s19
      %p182 = scmp.lt.s32.totalorder %s18, 1
      %s183 = scalar_select %p182, %s18, 1
      %p184 = scmp.lt.s32.totalorder %s181, 1
      %s185 = scalar_select %p184, %s181, 1
      %s186 = smul.addr %s183, 2
      %s187 = sadd.s32 %s185, %s186
      %s188 = smul.addr %s187, 4
      %s189 = scalar_lea.vmem %s3, %s188
      %s190 = smul.u32 2, %s19
      %p191 = scmp.lt.s32.totalorder %s18, 1
      %s192 = scalar_select %p191, %s18, 1
      %p193 = scmp.lt.s32.totalorder %s190, 1
      %s194 = scalar_select %p193, %s190, 1
      %s195 = smul.addr %s192, 2
      %s196 = sadd.s32 %s194, %s195
      %s197 = smul.addr %s196, 4
      %s198 = scalar_lea.vmem %s0, %s197
      %s199 = smul.u32 2, %s19
      %s200 = smul.u32 2, %s19
      %p201 = scmp.lt.s32.totalorder %s18, 1
      %s202 = scalar_select %p201, %s18, 1
      %p203 = scmp.lt.s32.totalorder %s200, 1
      %s204 = scalar_select %p203, %s200, 1
      %s205 = smul.addr %s202, 2
      %s206 = sadd.s32 %s204, %s205
      %s207 = smul.addr %s206, 4
      %s208 = scalar_lea.vmem %s3, %s207
      %s209 = smul.u32 2, %s19
      %v210 = vld [vmem:[%s198] sm:$0xff]
      %v212 = vcombine.high %v210, %v210
      %vm214 = vcmask 1043456
      %v215 = vsel %vm214, %v210, 0.0
      %v216 = vrot.slane %v215, 4
      %v217 = vadd.f32 %v215, %v216
      %v218 = vrot.slane %v217, 2
      %v219 = vadd.f32 %v217, %v218
      %v220 = vrot.slane %v219, 1
      %v221 = vadd.f32 %v219, %v220
      %v222 = vsel %vm214, %v212, 0.0
      %v223 = vrot.slane %v222, 4
      %v224 = vadd.f32 %v222, %v223
      %v225 = vrot.slane %v224, 2
      %v226 = vadd.f32 %v224, %v225
      %v227 = vrot.slane %v226, 1
      %v228 = vadd.f32 %v226, %v227
      %v229 = vmul.f32 %v221, 0.25
      %v230 = vmul.f32 %v228, 0.25
      %v231 = vmul.f32 %v210, %v210
      %v233 = vcombine.high %v231, %v231
      %v235 = vsel %vm214, %v231, 0.0
      %v236 = vrot.slane %v235, 4
      %v237 = vadd.f32 %v235, %v236
      %v238 = vrot.slane %v237, 2
      %v239 = vadd.f32 %v237, %v238
      %v240 = vrot.slane %v239, 1
      %v241 = vadd.f32 %v239, %v240
      %v242 = vsel %vm214, %v233, 0.0
      %v243 = vrot.slane %v242, 4
      %v244 = vadd.f32 %v242, %v243
      %v245 = vrot.slane %v244, 2
      %v246 = vadd.f32 %v244, %v245
      %v247 = vrot.slane %v246, 1
      %v248 = vadd.f32 %v246, %v247
      %v249 = vmul.f32 %v241, 0.25
      %v250 = vmul.f32 %v248, 0.25
      %v251 = vmul.f32 %v229, %v229
      %v252 = vmul.f32 %v230, %v230
      %v253 = vsub.f32 %v249, %v251
      %v254 = vsub.f32 %v250, %v252
      %v255 = vadd.f32 %v253, 1e-05
      %v256 = vadd.f32 %v254, 1e-05
      %v257 = vrsqrt.pop %v255
      %v258 = vrsqrt.pop %v256
      %v259 = vld [vmem:[%s1] sm:$0xf]
      %v260 = vld [vmem:[%s2] sm:$0xf]
      %v263 = vcombine.low %v229, %v230
      %v265 = vsub.f32 %v210, %v263
      %v268 = vcombine.low %v257, %v258
      %v270 = vmul.f32 %v265, %v268
      %272 = vset.pattern.permute.xlu0 0
      %273 = vperm.xlu0 %272, %v259
      %v274 = vpop.permute.xlu0 %273
      %v276 = vunpack.c.l.s4 839922192
      %v277 = vunpack.c.0.s8 %v276
      %v278 = vlaneseq
      %v279 = vshrl.u32 %v278, 7
      %v280 = vsub.s32 %v277, %v279
      %v281 = vrot.slane %v274, %v280
      %v283 = vmul.f32 %v270, %v281
      %285 = vset.pattern.permute.xlu0 0
      %286 = vperm.xlu0 %285, %v260
      %v287 = vpop.permute.xlu0 %286
      %v289 = vunpack.c.l.s4 839922192
      %v290 = vunpack.c.0.s8 %v289
      %v291 = vlaneseq
      %v292 = vshrl.u32 %v291, 7
      %v293 = vsub.s32 %v290, %v292
      %v294 = vrot.slane %v287, %v293
      %v296 = vadd.f32 %v283, %v294
      %297 = vst [vmem:[%s208] sm:$0xff] %v296
      %s298 = smul.u32 2, %s19
      %p299 = scmp.lt.s32.totalorder %s18, 1
      %s300 = scalar_select %p299, %s18, 1
      %p301 = scmp.lt.s32.totalorder %s298, 1
      %s302 = scalar_select %p301, %s298, 1
      %s303 = smul.addr %s300, 2
      %s304 = sadd.s32 %s302, %s303
      %s305 = smul.addr %s304, 4
      %s306 = scalar_lea.vmem %s3, %s305
      // Predicated region
      $region33: #{layer_norm_proxy.1} parent=31 // pred_check
        %p307 = pneg %p116
      $region34: #{layer_norm_proxy.1} parent=31 // pred_check_branch
        %309 = sbr.rel (%p307) target = $region36
      $region35: #{layer_norm_proxy.1} parent=31 // pred_region
        %s310 = smul.u32 2, %s19
      $region36: #{layer_norm_proxy.1} parent=31 // pred_fallthru
        _
    $region32: #{layer_norm_proxy.1} parent=5 // pred_fallthru
      _
    %p311 = scmp.le.s32.totalorder 2, %s9
    // Predicated region
    $region37: #{layer_norm_proxy.1} parent=5 // pred_check
      %p312 = pneg %p311
    $region38: #{layer_norm_proxy.1} parent=5 // pred_check_branch
      %314 = sbr.rel (%p312) target = $region40
    $region39: #{layer_norm_proxy.1} parent=5 // pred_region
      %s315 = ssub.s32 %s9, 2
      // Predicated region
      $region41: #{layer_norm_proxy.1} parent=39 // pred_check
        %p316 = pneg %p122
      $region42: #{layer_norm_proxy.1} parent=39 // pred_check_branch
        %318 = sbr.rel (%p316) target = $region44
      $region43: #{layer_norm_proxy.1} parent=39 // pred_region
        %s319 = smul.u32 2, %s21
        %p320 = scmp.lt.s32.totalorder %s20, 1
        %s321 = scalar_select %p320, %s20, 1
        %p322 = scmp.lt.s32.totalorder %s319, 1
        %s323 = scalar_select %p322, %s319, 1
        %s324 = smul.addr %s321, 2
        %s325 = sadd.s32 %s323, %s324
        %s326 = smul.addr %s325, 4
        %s327 = scalar_lea.vmem %s3, %s326
      $region44: #{layer_norm_proxy.1} parent=39 // pred_fallthru
        _
    $region40: #{layer_norm_proxy.1} parent=5 // pred_fallthru
      _
  $region6: #{layer_norm_proxy.1} parent=0 // loop_footer
    %s13 = sadd.s32 1, %s9
  $region7: #{layer_norm_proxy.1} parent=0 // loop_footer_branch
    %8 = sbr.rel target = $region3
  $region8: #{layer_norm_proxy.1} parent=0 // loop_exit
    _

</llo_original>
